<compile_context>
chip_gen: v7x
topology: tpu7x:2x2x1
jax: 0.10.0
libtpu: 0.0.40
codegen_flags: <defaults>
</compile_context>

<pallas_src>
import jax
import jax.numpy as jnp
from jax import lax
from jax.experimental import pallas as pl
from jax.experimental.pallas import tpu as pltpu


DIMS = [(22, 128), (128, 64), (64, 32), (32, 1)]   # (in_features, out_features)
_VMEM_LIMIT = 48 * 1024 * 1024                      # < v7x's 64 MiB, fine on v5e/v6e


def _round_up(n, m):
    return ((n + m - 1) // m) * m


def _cdiv(a, b):
    return -(-a // b)


def mlp_kernel(x_ref,
               w1t_ref, b1_ref,
               w2_ref, b2_ref,
               w3_ref, b3_ref,
               w4_ref, b4_ref,
               o_ref):
    """One batch tile.  x arrives batch-major (TM, 22) via a single contiguous
    DMA; fc2's transposed contraction flips the batch onto the lane axis so the
    final (1, TM) store is unmasked / lane-dense."""
    cdt = w1t_ref.dtype                                   # MXU compute dtype
    x = x_ref[...].astype(cdt)                            # (TM, 22)

    # fc1: (TM, 22) @ (22, 128) -> (TM, 128); batch still on sublanes.
    h1 = jnp.dot(x, w1t_ref[...], preferred_element_type=jnp.float32)
    h1 = jnp.maximum(h1 + b1_ref[...], 0.0).astype(cdt)   # bias/ReLU in f32

    # fc2: contract the 128-feature axis of BOTH operands -> (64, TM).
    # Batch moves onto the lane axis here (K=128-aligned transposed matmul).
    h2 = lax.dot_general(w2_ref[...], h1, (((1,), (1,)), ((), ())),
                         preferred_element_type=jnp.float32)
    h2 = jnp.maximum(h2 + b2_ref[...], 0.0).astype(cdt)   # (64, TM)

    # fc3: (32, 64) @ (64, TM) -> (32, TM).
    h3 = jnp.dot(w3_ref[...], h2, preferred_element_type=jnp.float32)
    h3 = jnp.maximum(h3 + b3_ref[...], 0.0)               # keep f32 for the VPU

    # fc4 (32 -> 1): an N=1 MXU matmul wastes the array; VPU mul + sublane reduce.
    y = jnp.sum(w4_ref[...] * h3, axis=0, keepdims=True) + b4_ref[...]  # (1, TM)
    o_ref[...] = y[None].astype(o_ref.dtype)              # (1, 1, TM), lane-dense


def _pick_tile(batch, tile_batch, x_itemsize, compute_itemsize):
    """Batch-tile heuristic: big enough to amortize step overhead, small enough
    to keep >= 4 grid steps for large batches (v7x megacore) and fit VMEM."""
    tm = min(int(tile_batch), _round_up(batch, 128))
    # Prefer >= 4 grid steps when the batch allows it (keeps both v7x cores busy).
    while tm >= 2048 and _cdiv(batch, tm) < 4:
        tm //= 2
    # Conservative per-sample VMEM footprint: double-buffered x tile, f32
    # accumulators, low-precision activation copies, double-buffered out row.
    per_sample = 2 * 22 * x_itemsize + 4 * (128 + 64 + 32) + 2 * 4
    if compute_itemsize < 4:
        per_sample += compute_itemsize * (22 + 128 + 64)
    budget = int(0.6 * _VMEM_LIMIT)                       # headroom for temporaries
    while tm > 128 and tm * per_sample > budget:
        tm //= 2
    return max(128, _round_up(tm, 128))


def regression_model_forward(x, params, *, tile_batch=8192,
                             compute_dtype=jnp.bfloat16, x_buffer_count=2):
    """x: (batch, 22).  params: [(w, b)] in PyTorch layout,
    w: (out_features, in_features), b: (out_features,)."""
    (w1, b1), (w2, b2), (w3, b3), (w4, b4) = params
    batch = x.shape[0]
    cdt = jnp.dtype(compute_dtype)

    tm = _pick_tile(batch, tile_batch, x.dtype.itemsize, cdt.itemsize)
    grid_m = _cdiv(batch, tm)
    padded = grid_m * tm
    if padded != batch:
        # Pad only (no transpose/cast pass): x streams batch-major into the kernel.
        x = jnp.pad(x, ((0, padded - batch), (0, 0)))

    # Tiny weight/bias operands; MXU layers in compute_dtype, VPU work in f32.
    w1t = w1.T.astype(cdt)                            # (22, 128)
    w2c = w2.astype(cdt)                              # (64, 128)
    w3c = w3.astype(cdt)                              # (32, 64)
    b1c = b1.reshape(1, -1).astype(jnp.float32)       # (1, 128)
    b2c = b2.reshape(-1, 1).astype(jnp.float32)       # (64, 1)
    b3c = b3.reshape(-1, 1).astype(jnp.float32)       # (32, 1)
    w4c = w4.reshape(-1, 1).astype(jnp.float32)       # (32, 1)
    b4c = b4.reshape(1, 1).astype(jnp.float32)        # (1, 1)

    def resident(a):
        # Constant block index -> block stays VMEM-resident across grid steps.
        return pl.BlockSpec(a.shape, lambda i: (0,) * a.ndim)

    x_spec_kwargs = {}
    if x_buffer_count != 2:        # optional deeper pipelining of the x stream
        x_spec_kwargs["pipeline_mode"] = pl.Buffered(x_buffer_count)
    x_spec = pl.BlockSpec((tm, 22), lambda i: (i, 0), **x_spec_kwargs)

    flops = 2 * padded * sum(fi * fo for fi, fo in DIMS)
    weight_bytes = sum(int(a.size) * a.dtype.itemsize
                       for a in (w1t, b1c, w2c, b2c, w3c, b3c, w4c, b4c))
    bytes_accessed = padded * 22 * x.dtype.itemsize + padded * 4 + weight_bytes

    out3d = pl.pallas_call(
        mlp_kernel,
        out_shape=jax.ShapeDtypeStruct((grid_m, 1, tm), jnp.float32),
        grid=(grid_m,),
        in_specs=[
            x_spec,                                   # streamed x tile
            resident(w1t), resident(b1c),
            resident(w2c), resident(b2c),
            resident(w3c), resident(b3c),
            resident(w4c), resident(b4c),
        ],
        out_specs=pl.BlockSpec((1, 1, tm), lambda i: (i, 0, 0)),
        compiler_params=pltpu.CompilerParams(
            dimension_semantics=("parallel",),        # megacore split on v7x
            vmem_limit_bytes=_VMEM_LIMIT,
        ),
        cost_estimate=pl.CostEstimate(flops=flops, transcendentals=0,
                                      bytes_accessed=bytes_accessed),
    )(x, w1t, b1c, w2c, b2c, w3c, b3c, w4c, b4c)

    return out3d.reshape(padded, 1)[:batch]


def init_params(key):
    """Deterministic init mimicking nn.Linear defaults, PyTorch layout."""
    params = []
    for fan_in, fan_out in DIMS:
        key, kw, kb = jax.random.split(key, 3)
        bound = 1.0 / float(fan_in) ** 0.5
        w = jax.random.uniform(kw, (fan_out, fan_in), jnp.float32, -bound, bound)
        b = jax.random.uniform(kb, (fan_out,), jnp.float32, -bound, bound)
        params.append((w, b))
    return params


def reference_forward(x, params):
    h = x
    for i, (w, b) in enumerate(params):
        h = h @ w.T + b
        if i < len(params) - 1:
            h = jnp.maximum(h, 0.0)
    return h


if __name__ == "__main__":
    key = jax.random.PRNGKey(0)
    key, kx = jax.random.split(key)
    params = init_params(key)

    batch = 8
    x = jax.random.normal(kx, (batch, 22), dtype=jnp.float32)
    ref = reference_forward(x, params)

    # Default path (bf16 MXU layers, f32 accumulation): loose tolerance.
    out = jax.block_until_ready(regression_model_forward(x, params))
    assert out.shape == (batch, 1), out.shape
    assert jnp.allclose(out, ref, atol=5e-2, rtol=5e-2), (
        f"bf16 max abs err {jnp.max(jnp.abs(out - ref))}")

    # f32 end-to-end: tight tolerance.
    out_f32 = jax.block_until_ready(
        regression_model_forward(x, params, compute_dtype=jnp.float32))
    assert jnp.allclose(out_f32, ref, atol=1e-3, rtol=1e-3), (
        f"f32 max abs err {jnp.max(jnp.abs(out_f32 - ref))}")

    # Multi-tile + batch-padding path (grid_m > 1, padded last tile).
    key, kx2 = jax.random.split(key)
    batch2 = 600
    x2 = jax.random.normal(kx2, (batch2, 22), dtype=jnp.float32)
    ref2 = reference_forward(x2, params)
    out2 = jax.block_until_ready(
        regression_model_forward(x2, params, tile_batch=256,
                                 compute_dtype=jnp.float32))
    assert out2.shape == (batch2, 1), out2.shape
    assert jnp.allclose(out2, ref2, atol=1e-3, rtol=1e-3), (
        f"multi-tile max abs err {jnp.max(jnp.abs(out2 - ref2))}")

    print("KERNEL_OK")
</pallas_src>

<mosaic_0001>
module attributes {stable_mosaic.version = 11 : i64} {
  func.func @mlp_kernel(%arg0: i32, %arg1: memref<128x22xf32, #tpu.memory_space<vmem>>, %arg2: memref<22x128xbf16, #tpu.memory_space<vmem>>, %arg3: memref<1x128xf32, #tpu.memory_space<vmem>>, %arg4: memref<64x128xbf16, #tpu.memory_space<vmem>>, %arg5: memref<64x1xf32, #tpu.memory_space<vmem>>, %arg6: memref<32x64xbf16, #tpu.memory_space<vmem>>, %arg7: memref<32x1xf32, #tpu.memory_space<vmem>>, %arg8: memref<32x1xf32, #tpu.memory_space<vmem>>, %arg9: memref<1x1xf32, #tpu.memory_space<vmem>>, %arg10: memref<1x1x128xf32, #tpu.memory_space<vmem>>) attributes {dimension_semantics = [#tpu.dimension_semantics<parallel>], iteration_bounds = array<i64: 1>, scalar_prefetch = 0 : i64, scratch_operands = 0 : i64, tpu.core_type = #tpu.core_type<tc>, window_params = [{transform_indices = @transform_0, window_bounds = array<i64: 128, 22>}, {pipeline_mode = #tpu.pipeline_mode<synchronous>, transform_indices = @transform_1, window_bounds = array<i64: 22, 128>}, {pipeline_mode = #tpu.pipeline_mode<synchronous>, transform_indices = @transform_2, window_bounds = array<i64: 1, 128>}, {pipeline_mode = #tpu.pipeline_mode<synchronous>, transform_indices = @transform_3, window_bounds = array<i64: 64, 128>}, {pipeline_mode = #tpu.pipeline_mode<synchronous>, transform_indices = @transform_4, window_bounds = array<i64: 64, 1>}, {pipeline_mode = #tpu.pipeline_mode<synchronous>, transform_indices = @transform_5, window_bounds = array<i64: 32, 64>}, {pipeline_mode = #tpu.pipeline_mode<synchronous>, transform_indices = @transform_6, window_bounds = array<i64: 32, 1>}, {pipeline_mode = #tpu.pipeline_mode<synchronous>, transform_indices = @transform_7, window_bounds = array<i64: 32, 1>}, {pipeline_mode = #tpu.pipeline_mode<synchronous>, transform_indices = @transform_8, window_bounds = array<i64: 1, 1>}, {transform_indices = @transform_9, window_bounds = array<i64: 1, 1, 128>}]} {
    %c0 = arith.constant 0 : index
    %c0_0 = arith.constant 0 : index
    %0 = vector.load %arg1[%c0, %c0_0] : memref<128x22xf32, #tpu.memory_space<vmem>>, vector<128x22xf32>
    %1 = arith.truncf %0 : vector<128x22xf32> to vector<128x22xbf16>
    %c0_1 = arith.constant 0 : index
    %c0_2 = arith.constant 0 : index
    %2 = vector.load %arg2[%c0_1, %c0_2] : memref<22x128xbf16, #tpu.memory_space<vmem>>, vector<22x128xbf16>
    %cst = arith.constant dense<0.000000e+00> : vector<128x128xf32>
    %3 = tpu.matmul %1, %2, %cst {dimension_numbers = #tpu.dot_dimension_numbers<[1], [0], [0], [1], [0, 0, 1, 1], [], []>} : vector<128x22xbf16>, vector<22x128xbf16>, vector<128x128xf32> -> vector<128x128xf32>
    %c0_3 = arith.constant 0 : index
    %c0_4 = arith.constant 0 : index
    %4 = vector.load %arg3[%c0_3, %c0_4] : memref<1x128xf32, #tpu.memory_space<vmem>>, vector<1x128xf32>
    %5 = vector.broadcast %4 : vector<1x128xf32> to vector<128x128xf32>
    %6 = arith.addf %3, %5 : vector<128x128xf32>
    %cst_5 = arith.constant 0.000000e+00 : f32
    %7 = vector.broadcast %cst_5 : f32 to vector<128x128xf32>
    %8 = arith.maximumf %6, %7 : vector<128x128xf32>
    %9 = arith.truncf %8 : vector<128x128xf32> to vector<128x128xbf16>
    %c0_6 = arith.constant 0 : index
    %c0_7 = arith.constant 0 : index
    %10 = vector.load %arg4[%c0_6, %c0_7] : memref<64x128xbf16, #tpu.memory_space<vmem>>, vector<64x128xbf16>
    %cst_8 = arith.constant dense<0.000000e+00> : vector<64x128xf32>
    %11 = tpu.matmul %10, %9, %cst_8 {dimension_numbers = #tpu.dot_dimension_numbers<[1], [1], [0], [0], [0, 0, 1, 0], [], []>} : vector<64x128xbf16>, vector<128x128xbf16>, vector<64x128xf32> -> vector<64x128xf32>
    %c0_9 = arith.constant 0 : index
    %c0_10 = arith.constant 0 : index
    %12 = vector.load %arg5[%c0_9, %c0_10] : memref<64x1xf32, #tpu.memory_space<vmem>>, vector<64x1xf32>
    %13 = vector.broadcast %12 : vector<64x1xf32> to vector<64x128xf32>
    %14 = arith.addf %11, %13 : vector<64x128xf32>
    %cst_11 = arith.constant 0.000000e+00 : f32
    %15 = vector.broadcast %cst_11 : f32 to vector<64x128xf32>
    %16 = arith.maximumf %14, %15 : vector<64x128xf32>
    %17 = arith.truncf %16 : vector<64x128xf32> to vector<64x128xbf16>
    %c0_12 = arith.constant 0 : index
    %c0_13 = arith.constant 0 : index
    %18 = vector.load %arg6[%c0_12, %c0_13] : memref<32x64xbf16, #tpu.memory_space<vmem>>, vector<32x64xbf16>
    %cst_14 = arith.constant dense<0.000000e+00> : vector<32x128xf32>
    %19 = tpu.matmul %18, %17, %cst_14 {dimension_numbers = #tpu.dot_dimension_numbers<[1], [0], [0], [1], [0, 0, 1, 1], [], []>} : vector<32x64xbf16>, vector<64x128xbf16>, vector<32x128xf32> -> vector<32x128xf32>
    %c0_15 = arith.constant 0 : index
    %c0_16 = arith.constant 0 : index
    %20 = vector.load %arg7[%c0_15, %c0_16] : memref<32x1xf32, #tpu.memory_space<vmem>>, vector<32x1xf32>
    %21 = vector.broadcast %20 : vector<32x1xf32> to vector<32x128xf32>
    %22 = arith.addf %19, %21 : vector<32x128xf32>
    %cst_17 = arith.constant 0.000000e+00 : f32
    %23 = vector.broadcast %cst_17 : f32 to vector<32x128xf32>
    %24 = arith.maximumf %22, %23 : vector<32x128xf32>
    %c0_18 = arith.constant 0 : index
    %c0_19 = arith.constant 0 : index
    %25 = vector.load %arg8[%c0_18, %c0_19] : memref<32x1xf32, #tpu.memory_space<vmem>>, vector<32x1xf32>
    %26 = vector.broadcast %25 : vector<32x1xf32> to vector<32x128xf32>
    %27 = arith.mulf %26, %24 : vector<32x128xf32>
    %cst_20 = arith.constant dense<0.000000e+00> : vector<128xf32>
    %28 = vector.multi_reduction <add>, %27, %cst_20 [0] : vector<32x128xf32> to vector<128xf32>
    %29 = vector.shape_cast %28 : vector<128xf32> to vector<1x128xf32>
    %c0_21 = arith.constant 0 : index
    %c0_22 = arith.constant 0 : index
    %30 = vector.load %arg9[%c0_21, %c0_22] : memref<1x1xf32, #tpu.memory_space<vmem>>, vector<1x1xf32>
    %31 = vector.broadcast %30 : vector<1x1xf32> to vector<1x128xf32>
    %32 = arith.addf %29, %31 : vector<1x128xf32>
    %33 = vector.shape_cast %32 : vector<1x128xf32> to vector<1x1x128xf32>
    %c0_23 = arith.constant 0 : index
    %c0_24 = arith.constant 0 : index
    %c0_25 = arith.constant 0 : index
    %34 = vector.load %arg10[%c0_23, %c0_24, %c0_25] : memref<1x1x128xf32, #tpu.memory_space<vmem>>, vector<1x1x128xf32>
    tpu.vector_store %arg10[%c0_23, %c0_24, %c0_25], %33 {strides = array<i32>} : memref<1x1x128xf32, #tpu.memory_space<vmem>>, vector<1x1x128xf32>,
    return
  }
  func.func @transform_0(%arg0: i32) -> (i32, i32) {
    %c0_i32 = arith.constant 0 : i32
    %c0_i32_0 = arith.constant 0 : i32
    return %arg0, %c0_i32 : i32, i32
  }
  func.func @transform_1(%arg0: i32) -> (i32, i32) {
    %c0_i32 = arith.constant 0 : i32
    %c0_i32_0 = arith.constant 0 : i32
    %c0_i32_1 = arith.constant 0 : i32
    return %c0_i32, %c0_i32_0 : i32, i32
  }
  func.func @transform_2(%arg0: i32) -> (i32, i32) {
    %c0_i32 = arith.constant 0 : i32
    %c0_i32_0 = arith.constant 0 : i32
    %c0_i32_1 = arith.constant 0 : i32
    return %c0_i32, %c0_i32_0 : i32, i32
  }
  func.func @transform_3(%arg0: i32) -> (i32, i32) {
    %c0_i32 = arith.constant 0 : i32
    %c0_i32_0 = arith.constant 0 : i32
    %c0_i32_1 = arith.constant 0 : i32
    return %c0_i32, %c0_i32_0 : i32, i32
  }
  func.func @transform_4(%arg0: i32) -> (i32, i32) {
    %c0_i32 = arith.constant 0 : i32
    %c0_i32_0 = arith.constant 0 : i32
    %c0_i32_1 = arith.constant 0 : i32
    return %c0_i32, %c0_i32_0 : i32, i32
  }
  func.func @transform_5(%arg0: i32) -> (i32, i32) {
    %c0_i32 = arith.constant 0 : i32
    %c0_i32_0 = arith.constant 0 : i32
    %c0_i32_1 = arith.constant 0 : i32
    return %c0_i32, %c0_i32_0 : i32, i32
  }
  func.func @transform_6(%arg0: i32) -> (i32, i32) {
    %c0_i32 = arith.constant 0 : i32
    %c0_i32_0 = arith.constant 0 : i32
    %c0_i32_1 = arith.constant 0 : i32
    return %c0_i32, %c0_i32_0 : i32, i32
  }
  func.func @transform_7(%arg0: i32) -> (i32, i32) {
    %c0_i32 = arith.constant 0 : i32
    %c0_i32_0 = arith.constant 0 : i32
    %c0_i32_1 = arith.constant 0 : i32
    return %c0_i32, %c0_i32_0 : i32, i32
  }
  func.func @transform_8(%arg0: i32) -> (i32, i32) {
    %c0_i32 = arith.constant 0 : i32
    %c0_i32_0 = arith.constant 0 : i32
    %c0_i32_1 = arith.constant 0 : i32
    return %c0_i32, %c0_i32_0 : i32, i32
  }
  func.func @transform_9(%arg0: i32) -> (i32, i32, i32) {
    %c0_i32 = arith.constant 0 : i32
    %c0_i32_0 = arith.constant 0 : i32
    %c0_i32_1 = arith.constant 0 : i32
    return %arg0, %c0_i32, %c0_i32_0 : i32, i32, i32
  }
}

</mosaic_0001>

<llo_original>
// kernel: tpu_custom_call.1
$region0: #{tpu_custom_call.1}
  #allocation0 [shape = 'u32[]', space=smem, size = 0x4, offset = 0x4, fixed_abs, tag = 'smem constant byte address 0x4 - core index']
  #allocation1 [shape = 'u32[144,128]{1,0:T(1,128)}', space=vmem, size = 0x12000, scoped, tag = 'internal scratch']
  #allocation2 [shape = 'f32[1,1]{1,0:T(1,128)S(1)}', space=vmem, size = 0x200, scoped, tag = 'scoped memory for tpu_custom_call.1']
  %s0 = inlined_call_operand.vmem [shape: f32[128,22], index: 0, kind: input, shape index: {}]
  %s1 = inlined_call_operand.vmem [shape: bf16[22,128], index: 1, kind: input, shape index: {}]
  %s2 = inlined_call_operand.vmem [shape: f32[1,128], index: 2, kind: input, shape index: {}]
  %s3 = inlined_call_operand.vmem [shape: bf16[64,128], index: 3, kind: input, shape index: {}]
  %s4 = inlined_call_operand.vmem [shape: f32[64,1], index: 4, kind: input, shape index: {}]
  %s5 = inlined_call_operand.vmem [shape: bf16[32,64], index: 5, kind: input, shape index: {}]
  %s6 = inlined_call_operand.vmem [shape: f32[32,1], index: 6, kind: input, shape index: {}]
  %s7 = inlined_call_operand.vmem [shape: f32[32,1], index: 7, kind: input, shape index: {}]
  %s8 = inlined_call_operand.<no memory space> [shape: f32[1,1], index: 8, kind: input, shape index: {}]
  %s9 = inlined_call_operand.hbm [shape: f32[1,1,128], index: 9, kind: output, shape index: {}]
  %s10 = sld [smem:[#allocation0]]
  $region46: #{tpu_custom_call.1} parent=0
    _
  %s12 = ssub.s32 1, %s10
  %s13 = scalar_select 0, %s12, %s10
  %v14 = vstv %s8
  %15 = vst [vmem:[#allocation2] sm:$0x1] %v14
  $region1: #{tpu_custom_call.1} parent=0
    #allocation3 [shape = 'u8[512]{0}', space=vmem, size = 0x400, scoped, tag = 'output window, operand 0, single buffered']
    #allocation4 [shape = 's32[1]{0}', space=sflag, size = 0x4, scoped, tag = 'scoped memory for tpu_custom_call.1']
    %16 = vsyncpa [#allocation4], 0
    // Predicated region
    $region2: #{tpu_custom_call.1} parent=1 // pred_check
      _
    $region3: #{tpu_custom_call.1} parent=1 // pred_check_branch
      %18 = sbr.rel (0) target = $region5
    $region4: #{tpu_custom_call.1} parent=1 // pred_region
      _
    $region5: #{tpu_custom_call.1} parent=1 // pred_fallthru
      _
    // Predicated region
    $region6: #{tpu_custom_call.1} parent=1 // pred_check
      _
    $region7: #{tpu_custom_call.1} parent=1 // pred_check_branch
      %20 = sbr.rel (0) target = $region9
    $region8: #{tpu_custom_call.1} parent=1 // pred_region
      _
    $region9: #{tpu_custom_call.1} parent=1 // pred_fallthru
      _
    // Predicated region
    $region10: #{tpu_custom_call.1} parent=1 // pred_check
      _
    $region11: #{tpu_custom_call.1} parent=1 // pred_check_branch
      %22 = sbr.rel (0) target = $region13
    $region12: #{tpu_custom_call.1} parent=1 // pred_region
      _
    $region13: #{tpu_custom_call.1} parent=1 // pred_fallthru
      _
    // Predicated region
    $region14: #{tpu_custom_call.1} parent=1 // pred_check
      _
    $region15: #{tpu_custom_call.1} parent=1 // pred_check_branch
      %24 = sbr.rel (0) target = $region17
    $region16: #{tpu_custom_call.1} parent=1 // pred_region
      _
    $region17: #{tpu_custom_call.1} parent=1 // pred_fallthru
      _
    // Predicated region
    $region18: #{tpu_custom_call.1} parent=1 // pred_check
      _
    $region19: #{tpu_custom_call.1} parent=1 // pred_check_branch
      %26 = sbr.rel (0) target = $region21
    $region20: #{tpu_custom_call.1} parent=1 // pred_region
      _
    $region21: #{tpu_custom_call.1} parent=1 // pred_fallthru
      _
    // Predicated region
    $region22: #{tpu_custom_call.1} parent=1 // pred_check
      _
    $region23: #{tpu_custom_call.1} parent=1 // pred_check_branch
      %28 = sbr.rel (0) target = $region25
    $region24: #{tpu_custom_call.1} parent=1 // pred_region
      _
    $region25: #{tpu_custom_call.1} parent=1 // pred_fallthru
      _
    // Predicated region
    $region26: #{tpu_custom_call.1} parent=1 // pred_check
      _
    $region27: #{tpu_custom_call.1} parent=1 // pred_check_branch
      %30 = sbr.rel (0) target = $region29
    $region28: #{tpu_custom_call.1} parent=1 // pred_region
      _
    $region29: #{tpu_custom_call.1} parent=1 // pred_fallthru
      _
    // Predicated region
    $region30: #{tpu_custom_call.1} parent=1 // pred_check
      _
    $region31: #{tpu_custom_call.1} parent=1 // pred_check_branch
      %32 = sbr.rel (0) target = $region33
    $region32: #{tpu_custom_call.1} parent=1 // pred_region
      _
    $region33: #{tpu_custom_call.1} parent=1 // pred_fallthru
      _
    // Predicated region
    $region34: #{tpu_custom_call.1} parent=1 // pred_check
      _
    $region35: #{tpu_custom_call.1} parent=1 // pred_check_branch
      %34 = sbr.rel (0) target = $region37
    $region36: #{tpu_custom_call.1} parent=1 // pred_region
      _
    $region37: #{tpu_custom_call.1} parent=1 // pred_fallthru
      _
    %v36 = vld [vmem:[%s0] sm:$0xff]
    %v37 = vld [vmem:[%s0 + $0x8] sm:$0xff]
    %v38 = vld [vmem:[%s0 + $0x10] sm:$0xff]
    %v39 = vld [vmem:[%s0 + $0x18] sm:$0xff]
    %v40 = vld [vmem:[%s0 + $0x20] sm:$0xff]
    %v41 = vld [vmem:[%s0 + $0x28] sm:$0xff]
    %v42 = vld [vmem:[%s0 + $0x30] sm:$0xff]
    %v43 = vld [vmem:[%s0 + $0x38] sm:$0xff]
    %v44 = vld [vmem:[%s0 + $0x40] sm:$0xff]
    %v45 = vld [vmem:[%s0 + $0x48] sm:$0xff]
    %v46 = vld [vmem:[%s0 + $0x50] sm:$0xff]
    %v47 = vld [vmem:[%s0 + $0x58] sm:$0xff]
    %v48 = vld [vmem:[%s0 + $0x60] sm:$0xff]
    %v49 = vld [vmem:[%s0 + $0x68] sm:$0xff]
    %v50 = vld [vmem:[%s0 + $0x70] sm:$0xff]
    %v51 = vld [vmem:[%s0 + $0x78] sm:$0xff]
    %v52 = vpack.c.bf16 %v37, %v36
    %v53 = vpack.c.bf16 %v39, %v38
    %v54 = vpack.c.bf16 %v41, %v40
    %v55 = vpack.c.bf16 %v43, %v42
    %v56 = vpack.c.bf16 %v45, %v44
    %v57 = vpack.c.bf16 %v47, %v46
    %v58 = vpack.c.bf16 %v49, %v48
    %v59 = vpack.c.bf16 %v51, %v50
    %v60 = vld [vmem:[%s1] sm:$0xf]
    %v61 = vld [vmem:[%s1 + $0x4] sm:$0xf]
    %v62 = vld [vmem:[%s1 + $0x8] sm:$0x7]
    %v63 = vld [vmem:[%s2] sm:$0x1]
    %v65 = vlaneseq
    %v66 = vshrl.u32 %v65, 7
    %v67 = vsub.s32 0, %v66
    %v68 = vrot.slane %v63, %v67
    %v73 = vunpack.c.l.b16 %v60
    %v74 = vunpack.c.l.b16 %v61
    %v75 = vunpack.c.l.b16 %v62
    %v76 = vpack.c.b16 %v74, %v73
    %v77 = vpack.c.b16 %v75, %v75
    %vm79 = vcmask 179200
    %v81 = vsel %vm79, %v52, 0
    %v84 = vsel %vm79, %v53, 0
    %v87 = vsel %vm79, %v54, 0
    %v90 = vsel %vm79, %v55, 0
    %v93 = vsel %vm79, %v56, 0
    %v96 = vsel %vm79, %v57, 0
    %v99 = vsel %vm79, %v58, 0
    %v102 = vsel %vm79, %v59, 0
    %vm104 = vcmask 1042432
    %v106 = vsel %vm104, %v77, 0
    %108 = vmatprep.subr.bf16.mxu0 0
    %109 = vmatpush1.bf16.msra.mxu0 %v76
    %110 = vmatprep.subr.bf16.mxu0 0
    %111 = vmatpush1.bf16.msra.mxu0 %v106
    %112 = vmatprep.subr.bf16.mxu0 0
    %113 = vmatpush1.bf16.msra.mxu0 0
    %114 = vmatprep.subr.bf16.mxu0 0
    %115 = vmatpush1.bf16.msra.mxu0 0
    %116 = vmatprep.subr.bf16.mxu0 0
    %117 = vmatpush1.bf16.msra.mxu0 0
    %118 = vmatprep.subr.bf16.mxu0 0
    %119 = vmatpush1.bf16.msra.mxu0 0
    %120 = vmatprep.subr.bf16.mxu0 0
    %121 = vmatpush1.bf16.msra.mxu0 0
    %122 = vmatprep.subr.bf16.mxu0 0
    %123 = vmatpush1.bf16.msra.mxu0 0
    %124 = vmatprep.subr.bf16.mxu0 0
    %125 = vmatpush1.bf16.msra.mxu0 0
    %126 = vmatprep.subr.bf16.mxu0 0
    %127 = vmatpush1.bf16.msra.mxu0 0
    %128 = vmatprep.subr.bf16.mxu0 0
    %129 = vmatpush1.bf16.msra.mxu0 0
    %130 = vmatprep.subr.bf16.mxu0 0
    %131 = vmatpush1.bf16.msra.mxu0 0
    %132 = vmatprep.subr.bf16.mxu0 0
    %133 = vmatpush1.bf16.msra.mxu0 0
    %134 = vmatprep.subr.bf16.mxu0 0
    %135 = vmatpush1.bf16.msra.mxu0 0
    %136 = vmatprep.subr.bf16.mxu0 0
    %137 = vmatpush1.bf16.msra.mxu0 0
    %138 = vmatprep.subr.bf16.mxu0 0
    %139 = vmatpush1.bf16.msra.mxu0 0
    %140 = vmatprep.mubr.bf16.mxu0 0
    %141 = vmatmul.mubr.bf16.gmra.mrb[0].mxu0 %v81
    %v142 = vpop.f32.mrb[0].mxu0
    %v143 = vadd.f32 %v68, %v142
    %v144 = vpop.f32.mrb[0].mxu0
    %v145 = vpop.f32.mrb[0].mxu0
    %v146 = vadd.f32 %v68, %v145
    %v147 = vpop.f32.mrb[0].mxu0
    %148 = vmatprep.mubr.bf16.mxu0 0
    %149 = vmatmul.mubr.bf16.gmra.mrb[0].mxu0 %v84
    %v150 = vpop.f32.mrb[0].mxu0
    %v151 = vadd.f32 %v68, %v150
    %v152 = vpop.f32.mrb[0].mxu0
    %v153 = vpop.f32.mrb[0].mxu0
    %v154 = vadd.f32 %v68, %v153
    %v155 = vpop.f32.mrb[0].mxu0
    %156 = vmatprep.mubr.bf16.mxu0 0
    %157 = vmatmul.mubr.bf16.gmra.mrb[0].mxu0 %v87
    %v158 = vpop.f32.mrb[0].mxu0
    %v159 = vadd.f32 %v68, %v158
    %v160 = vpop.f32.mrb[0].mxu0
    %v161 = vpop.f32.mrb[0].mxu0
    %v162 = vadd.f32 %v68, %v161
    %v163 = vpop.f32.mrb[0].mxu0
    %164 = vmatprep.mubr.bf16.mxu0 0
    %165 = vmatmul.mubr.bf16.gmra.mrb[0].mxu0 %v90
    %v166 = vpop.f32.mrb[0].mxu0
    %v167 = vadd.f32 %v68, %v166
    %v168 = vpop.f32.mrb[0].mxu0
    %v169 = vpop.f32.mrb[0].mxu0
    %v170 = vadd.f32 %v68, %v169
    %v171 = vpop.f32.mrb[0].mxu0
    %172 = vmatprep.mubr.bf16.mxu0 0
    %173 = vmatmul.mubr.bf16.gmra.mrb[0].mxu0 %v93
    %v174 = vpop.f32.mrb[0].mxu0
    %v175 = vadd.f32 %v68, %v174
    %v176 = vpop.f32.mrb[0].mxu0
    %v177 = vpop.f32.mrb[0].mxu0
    %v178 = vadd.f32 %v68, %v177
    %v179 = vpop.f32.mrb[0].mxu0
    %180 = vmatprep.mubr.bf16.mxu0 0
    %181 = vmatmul.mubr.bf16.gmra.mrb[0].mxu0 %v96
    %v182 = vpop.f32.mrb[0].mxu0
    %v183 = vadd.f32 %v68, %v182
    %v184 = vpop.f32.mrb[0].mxu0
    %v185 = vpop.f32.mrb[0].mxu0
    %v186 = vadd.f32 %v68, %v185
    %v187 = vpop.f32.mrb[0].mxu0
    %188 = vmatprep.mubr.bf16.mxu0 0
    %189 = vmatmul.mubr.bf16.gmra.mrb[0].mxu0 %v99
    %v190 = vpop.f32.mrb[0].mxu0
    %v191 = vadd.f32 %v68, %v190
    %v192 = vpop.f32.mrb[0].mxu0
    %v193 = vpop.f32.mrb[0].mxu0
    %v194 = vadd.f32 %v68, %v193
    %v195 = vpop.f32.mrb[0].mxu0
    %196 = vmatprep.mubr.bf16.mxu0 0
    %197 = vmatmul.mubr.bf16.gmra.mrb[0].mxu0 %v102
    %v198 = vpop.f32.mrb[0].mxu0
    %v199 = vadd.f32 %v68, %v198
    %v200 = vpop.f32.mrb[0].mxu0
    %v201 = vpop.f32.mrb[0].mxu0
    %v202 = vadd.f32 %v68, %v201
    %v203 = vpop.f32.mrb[0].mxu0
    %204 = vdwg.mxu0
    %v205 = vmax.f32 %v143, 0.0
    %v206 = vmax.f32 %v146, 0.0
    %v207 = vmax.f32 %v151, 0.0
    %v208 = vmax.f32 %v154, 0.0
    %v209 = vmax.f32 %v159, 0.0
    %v210 = vmax.f32 %v162, 0.0
    %v211 = vmax.f32 %v167, 0.0
    %v212 = vmax.f32 %v170, 0.0
    %v213 = vmax.f32 %v175, 0.0
    %v214 = vmax.f32 %v178, 0.0
    %v215 = vmax.f32 %v183, 0.0
    %v216 = vmax.f32 %v186, 0.0
    %v217 = vmax.f32 %v191, 0.0
    %v218 = vmax.f32 %v194, 0.0
    %v219 = vmax.f32 %v199, 0.0
    %v220 = vmax.f32 %v202, 0.0
    %v221 = vpack.c.bf16 %v206, %v205
    %v222 = vpack.c.bf16 %v208, %v207
    %v223 = vpack.c.bf16 %v210, %v209
    %v224 = vpack.c.bf16 %v212, %v211
    %v225 = vpack.c.bf16 %v214, %v213
    %v226 = vpack.c.bf16 %v216, %v215
    %v227 = vpack.c.bf16 %v218, %v217
    %v228 = vpack.c.bf16 %v220, %v219
    %v229 = vld [vmem:[%s3] sm:$0xf]
    %v230 = vld [vmem:[%s3 + $0x4] sm:$0xf]
    %v231 = vld [vmem:[%s3 + $0x8] sm:$0xf]
    %v232 = vld [vmem:[%s3 + $0xc] sm:$0xf]
    %v233 = vld [vmem:[%s3 + $0x10] sm:$0xf]
    %v234 = vld [vmem:[%s3 + $0x14] sm:$0xf]
    %v235 = vld [vmem:[%s3 + $0x18] sm:$0xf]
    %v236 = vld [vmem:[%s3 + $0x1c] sm:$0xf]
    %v237 = vld [vmem:[%s4] sm:$0xff]
    %v238 = vld [vmem:[%s4 + $0x8] sm:$0xff]
    %v239 = vld [vmem:[%s4 + $0x10] sm:$0xff]
    %v240 = vld [vmem:[%s4 + $0x18] sm:$0xff]
    %v241 = vld [vmem:[%s4 + $0x20] sm:$0xff]
    %v242 = vld [vmem:[%s4 + $0x28] sm:$0xff]
    %v243 = vld [vmem:[%s4 + $0x30] sm:$0xff]
    %v244 = vld [vmem:[%s4 + $0x38] sm:$0xff]
    %246 = vset.pattern.permute.xlu0 0
    %247 = vperm.xlu0 %246, %v237
    %v248 = vpop.permute.xlu0 %247
    %251 = vset.pattern.permute.xlu0 0
    %252 = vperm.xlu0 %251, %v238
    %v253 = vpop.permute.xlu0 %252
    %256 = vset.pattern.permute.xlu0 0
    %257 = vperm.xlu0 %256, %v239
    %v258 = vpop.permute.xlu0 %257
    %261 = vset.pattern.permute.xlu0 0
    %262 = vperm.xlu0 %261, %v240
    %v263 = vpop.permute.xlu0 %262
    %266 = vset.pattern.permute.xlu0 0
    %267 = vperm.xlu0 %266, %v241
    %v268 = vpop.permute.xlu0 %267
    %271 = vset.pattern.permute.xlu0 0
    %272 = vperm.xlu0 %271, %v242
    %v273 = vpop.permute.xlu0 %272
    %276 = vset.pattern.permute.xlu0 0
    %277 = vperm.xlu0 %276, %v243
    %v278 = vpop.permute.xlu0 %277
    %281 = vset.pattern.permute.xlu0 0
    %282 = vperm.xlu0 %281, %v244
    %v283 = vpop.permute.xlu0 %282
    %v293 = vunpack.c.l.b16 %v229
    %v294 = vunpack.c.l.b16 %v230
    %v295 = vunpack.c.l.b16 %v231
    %v296 = vunpack.c.l.b16 %v232
    %v297 = vunpack.c.l.b16 %v233
    %v298 = vunpack.c.l.b16 %v234
    %v299 = vunpack.c.l.b16 %v235
    %v300 = vunpack.c.l.b16 %v236
    %v301 = vpack.c.b16 %v294, %v293
    %v302 = vpack.c.b16 %v296, %v295
    %v303 = vpack.c.b16 %v298, %v297
    %v304 = vpack.c.b16 %v300, %v299
    %309 = vmatprep.subr.bf16.mxu0 0
    %310 = vmatpush1.bf16.xpose.msra.mxu0 %v221
    %311 = vmatprep.subr.bf16.mxu0 0
    %312 = vmatpush1.bf16.xpose.msra.mxu0 %v222
    %313 = vmatprep.subr.bf16.mxu0 0
    %314 = vmatpush1.bf16.xpose.msra.mxu0 %v223
    %315 = vmatprep.subr.bf16.mxu0 0
    %316 = vmatpush1.bf16.xpose.msra.mxu0 %v224
    %317 = vmatprep.subr.bf16.mxu0 0
    %318 = vmatpush1.bf16.xpose.msra.mxu0 %v225
    %319 = vmatprep.subr.bf16.mxu0 0
    %320 = vmatpush1.bf16.xpose.msra.mxu0 %v226
    %321 = vmatprep.subr.bf16.mxu0 0
    %322 = vmatpush1.bf16.xpose.msra.mxu0 %v227
    %323 = vmatprep.subr.bf16.mxu0 0
    %324 = vmatpush1.bf16.xpose.msra.mxu0 %v228
    %325 = vmatprep.subr.bf16.mxu0 0
    %326 = vmatpush1.bf16.xpose.msra.mxu0 0
    %327 = vmatprep.subr.bf16.mxu0 0
    %328 = vmatpush1.bf16.xpose.msra.mxu0 0
    %329 = vmatprep.subr.bf16.mxu0 0
    %330 = vmatpush1.bf16.xpose.msra.mxu0 0
    %331 = vmatprep.subr.bf16.mxu0 0
    %332 = vmatpush1.bf16.xpose.msra.mxu0 0
    %333 = vmatprep.subr.bf16.mxu0 0
    %334 = vmatpush1.bf16.xpose.msra.mxu0 0
    %335 = vmatprep.subr.bf16.mxu0 0
    %336 = vmatpush1.bf16.xpose.msra.mxu0 0
    %337 = vmatprep.subr.bf16.mxu0 0
    %338 = vmatpush1.bf16.xpose.msra.mxu0 0
    %339 = vmatprep.subr.bf16.mxu0 0
    %340 = vmatpush1.bf16.xpose.msra.mxu0 0
    %341 = vmatprep.mubr.bf16.mxu0 0
    %342 = vmatmul.mubr.bf16.gmra.mrb[0].mxu0 %v301
    %v343 = vpop.f32.mrb[0].mxu0
    %v344 = vadd.f32 %v248, %v343
    %v345 = vpop.f32.mrb[0].mxu0
    %v346 = vpop.f32.mrb[0].mxu0
    %v347 = vadd.f32 %v253, %v346
    %v348 = vpop.f32.mrb[0].mxu0
    %349 = vmatprep.mubr.bf16.mxu0 0
    %350 = vmatmul.mubr.bf16.gmra.mrb[0].mxu0 %v302
    %v351 = vpop.f32.mrb[0].mxu0
    %v352 = vadd.f32 %v258, %v351
    %v353 = vpop.f32.mrb[0].mxu0
    %v354 = vpop.f32.mrb[0].mxu0
    %v355 = vadd.f32 %v263, %v354
    %v356 = vpop.f32.mrb[0].mxu0
    %357 = vmatprep.mubr.bf16.mxu0 0
    %358 = vmatmul.mubr.bf16.gmra.mrb[0].mxu0 %v303
    %v359 = vpop.f32.mrb[0].mxu0
    %v360 = vadd.f32 %v268, %v359
    %v361 = vpop.f32.mrb[0].mxu0
    %v362 = vpop.f32.mrb[0].mxu0
    %v363 = vadd.f32 %v273, %v362
    %v364 = vpop.f32.mrb[0].mxu0
    %365 = vmatprep.mubr.bf16.mxu0 0
    %366 = vmatmul.mubr.bf16.gmra.mrb[0].mxu0 %v304
    %v367 = vpop.f32.mrb[0].mxu0
    %v368 = vadd.f32 %v278, %v367
    %v369 = vpop.f32.mrb[0].mxu0
    %v370 = vpop.f32.mrb[0].mxu0
    %v371 = vadd.f32 %v283, %v370
    %v372 = vpop.f32.mrb[0].mxu0
    %373 = vdwg.mxu0
    %v374 = vmax.f32 %v344, 0.0
    %v375 = vmax.f32 %v347, 0.0
    %v376 = vmax.f32 %v352, 0.0
    %v377 = vmax.f32 %v355, 0.0
    %v378 = vmax.f32 %v360, 0.0
    %v379 = vmax.f32 %v363, 0.0
    %v380 = vmax.f32 %v368, 0.0
    %v381 = vmax.f32 %v371, 0.0
    %v382 = vpack.c.bf16 %v375, %v374
    %v383 = vpack.c.bf16 %v377, %v376
    %v384 = vpack.c.bf16 %v379, %v378
    %v385 = vpack.c.bf16 %v381, %v380
    %v386 = vld [vmem:[%s5] sm:$0xf]
    %v387 = vld [vmem:[%s5 + $0x4] sm:$0xf]
    %v388 = vld [vmem:[%s5 + $0x8] sm:$0xf]
    %v389 = vld [vmem:[%s5 + $0xc] sm:$0xf]
    %v390 = vld [vmem:[%s6] sm:$0xff]
    %v391 = vld [vmem:[%s6 + $0x8] sm:$0xff]
    %v392 = vld [vmem:[%s6 + $0x10] sm:$0xff]
    %v393 = vld [vmem:[%s6 + $0x18] sm:$0xff]
    %395 = vset.pattern.permute.xlu0 0
    %396 = vperm.xlu0 %395, %v390
    %v397 = vpop.permute.xlu0 %396
    %400 = vset.pattern.permute.xlu0 0
    %401 = vperm.xlu0 %400, %v391
    %v402 = vpop.permute.xlu0 %401
    %405 = vset.pattern.permute.xlu0 0
    %406 = vperm.xlu0 %405, %v392
    %v407 = vpop.permute.xlu0 %406
    %410 = vset.pattern.permute.xlu0 0
    %411 = vperm.xlu0 %410, %v393
    %v412 = vpop.permute.xlu0 %411
    %v418 = vunpack.c.l.b16 %v386
    %v419 = vunpack.c.l.b16 %v387
    %v420 = vunpack.c.l.b16 %v388
    %v421 = vunpack.c.l.b16 %v389
    %v422 = vpack.c.b16 %v419, %v418
    %v423 = vpack.c.b16 %v421, %v420
    %vm424 = vcmask 523264
    %v426 = vsel %vm424, %v422, 0
    %v429 = vsel %vm424, %v423, 0
    %431 = vmatprep.subr.bf16.mxu0 0
    %432 = vmatpush1.bf16.msra.mxu0 %v382
    %433 = vmatprep.subr.bf16.mxu0 0
    %434 = vmatpush1.bf16.msra.mxu0 %v383
    %435 = vmatprep.subr.bf16.mxu0 0
    %436 = vmatpush1.bf16.msra.mxu0 %v384
    %437 = vmatprep.subr.bf16.mxu0 0
    %438 = vmatpush1.bf16.msra.mxu0 %v385
    %439 = vmatprep.subr.bf16.mxu0 0
    %440 = vmatpush1.bf16.msra.mxu0 0
    %441 = vmatprep.subr.bf16.mxu0 0
    %442 = vmatpush1.bf16.msra.mxu0 0
    %443 = vmatprep.subr.bf16.mxu0 0
    %444 = vmatpush1.bf16.msra.mxu0 0
    %445 = vmatprep.subr.bf16.mxu0 0
    %446 = vmatpush1.bf16.msra.mxu0 0
    %447 = vmatprep.subr.bf16.mxu0 0
    %448 = vmatpush1.bf16.msra.mxu0 0
    %449 = vmatprep.subr.bf16.mxu0 0
    %450 = vmatpush1.bf16.msra.mxu0 0
    %451 = vmatprep.subr.bf16.mxu0 0
    %452 = vmatpush1.bf16.msra.mxu0 0
    %453 = vmatprep.subr.bf16.mxu0 0
    %454 = vmatpush1.bf16.msra.mxu0 0
    %455 = vmatprep.subr.bf16.mxu0 0
    %456 = vmatpush1.bf16.msra.mxu0 0
    %457 = vmatprep.subr.bf16.mxu0 0
    %458 = vmatpush1.bf16.msra.mxu0 0
    %459 = vmatprep.subr.bf16.mxu0 0
    %460 = vmatpush1.bf16.msra.mxu0 0
    %461 = vmatprep.subr.bf16.mxu0 0
    %462 = vmatpush1.bf16.msra.mxu0 0
    %463 = vmatprep.mubr.bf16.mxu0 0
    %464 = vmatmul.mubr.bf16.gmra.mrb[0].mxu0 %v426
    %v465 = vpop.f32.mrb[0].mxu0
    %v466 = vadd.f32 %v397, %v465
    %v467 = vpop.f32.mrb[0].mxu0
    %v468 = vpop.f32.mrb[0].mxu0
    %v469 = vadd.f32 %v402, %v468
    %v470 = vpop.f32.mrb[0].mxu0
    %471 = vmatprep.mubr.bf16.mxu0 0
    %472 = vmatmul.mubr.bf16.gmra.mrb[0].mxu0 %v429
    %v473 = vpop.f32.mrb[0].mxu0
    %v474 = vadd.f32 %v407, %v473
    %v475 = vpop.f32.mrb[0].mxu0
    %v476 = vpop.f32.mrb[0].mxu0
    %v477 = vadd.f32 %v412, %v476
    %v478 = vpop.f32.mrb[0].mxu0
    %479 = vdwg.mxu0
    %v480 = vmax.f32 %v466, 0.0
    %v481 = vmax.f32 %v469, 0.0
    %v482 = vmax.f32 %v474, 0.0
    %v483 = vmax.f32 %v477, 0.0
    %v484 = vld [vmem:[%s7] sm:$0xff]
    %v485 = vld [vmem:[%s7 + $0x8] sm:$0xff]
    %v486 = vld [vmem:[%s7 + $0x10] sm:$0xff]
    %v487 = vld [vmem:[%s7 + $0x18] sm:$0xff]
    %489 = vset.pattern.permute.xlu0 0
    %490 = vperm.xlu0 %489, %v484
    %v491 = vpop.permute.xlu0 %490
    %494 = vset.pattern.permute.xlu0 0
    %495 = vperm.xlu0 %494, %v485
    %v496 = vpop.permute.xlu0 %495
    %499 = vset.pattern.permute.xlu0 0
    %500 = vperm.xlu0 %499, %v486
    %v501 = vpop.permute.xlu0 %500
    %504 = vset.pattern.permute.xlu0 0
    %505 = vperm.xlu0 %504, %v487
    %v506 = vpop.permute.xlu0 %505
    %v508 = vmul.f32 %v491, %v480
    %v509 = vmul.f32 %v496, %v481
    %v510 = vmul.f32 %v501, %v482
    %v511 = vmul.f32 %v506, %v483
    %v512 = vadd.f32 %v508, %v509
    %v513 = vadd.f32 %v512, %v510
    %v514 = vadd.f32 %v513, %v511
    %v515 = vrot.slane %v514, 4
    %v516 = vadd.f32 %v514, %v515
    %v517 = vrot.slane %v516, 2
    %v518 = vadd.f32 %v516, %v517
    %v519 = vrot.slane %v518, 1
    %v520 = vadd.f32 %v518, %v519
    %v521 = vld [vmem:[#allocation2] sm:$0x1]
    %523 = vset.pattern.permute.xlu0 0
    %524 = vperm.xlu0 %523, %v521
    %v525 = vpop.permute.xlu0 %524
    %v527 = vlaneseq
    %v528 = vshrl.u32 %v527, 7
    %v529 = vsub.s32 0, %v528
    %v530 = vrot.slane %v525, %v529
    %v531 = vadd.f32 %v520, %v530
    %532 = vst [vmem:[#allocation3] sm:$0x1] %v531
    // Predicated region
    $region38: #{tpu_custom_call.1} parent=1 // pred_check
      _
    $region39: #{tpu_custom_call.1} parent=1 // pred_check_branch
      %534 = sbr.rel (0) target = $region41
    $region40: #{tpu_custom_call.1} parent=1 // pred_region
      %s536 = ssub.s32 16, 16
      %537 = vsyncadd [#allocation4], %s536
      %s539 = sshll.u32 [#allocation3], 4
      %s540 = int_to_ptr.vmem [resolvable:$true] %s539
      %542 = dma.vmem_to_hbm [thread:$0]  %s540, 16, %s9, [#allocation4]
    $region41: #{tpu_custom_call.1} parent=1 // pred_fallthru
      _
    // Predicated region
    $region42: #{tpu_custom_call.1} parent=1 // pred_check
      _
    $region43: #{tpu_custom_call.1} parent=1 // pred_check_branch
      %544 = sbr.rel (0) target = $region45
    $region44: #{tpu_custom_call.1} parent=1 // pred_region
      %545 = dma.done [#allocation4], 16
    $region45: #{tpu_custom_call.1} parent=1 // pred_fallthru
      _
    %546 = vsyncpa [#allocation4], 1

</llo_original>
